<compile_context>
chip_gen: v7x
topology: tpu7x:2x2x1
jax: 0.10.0
libtpu: 0.0.40
codegen_flags: <defaults>
</compile_context>

<pallas_src>
import functools

import jax
import jax.numpy as jnp
from jax.experimental import pallas as pl
from jax.experimental.pallas import tpu as pltpu


def _round_up(x, m):
    return ((x + m - 1) // m) * m


def _actor_kernel(x_ref, w1_ref, b1_ref, w2_ref, b2_ref, w3_ref, b3_ref,
                  o_ref, *, max_action):
    mm_dtype = w1_ref.dtype  # f32 (default) or bf16 (fast path)

    # Layer 1: Linear(state_dim, 512 padded) + ReLU  (MXU, f32 accumulate)
    h1 = jnp.dot(x_ref[...], w1_ref[...], preferred_element_type=jnp.float32)
    h1 = jnp.maximum(h1 + b1_ref[...], 0.0)

    # Layer 2: Linear(512, 384 padded) + ReLU
    h2 = jnp.dot(h1.astype(mm_dtype), w2_ref[...],
                 preferred_element_type=jnp.float32)
    h2 = jnp.maximum(h2 + b2_ref[...], 0.0)

    # Layer 3: Linear(384, 128 padded) -> tanh -> * max_action
    a = jnp.dot(h2.astype(mm_dtype), w3_ref[...],
                preferred_element_type=jnp.float32)
    a = jnp.tanh(a + b3_ref[...]) * jnp.float32(max_action)

    # torch.round (half-to-even) then .int(); lane-dense (TB, 128) store.
    o_ref[...] = jnp.round(a).astype(jnp.int32)


def _pad2d(a, rows, cols):
    """Zero-pad a 2-D array up to (rows, cols)."""
    return jnp.pad(a, ((0, rows - a.shape[0]), (0, cols - a.shape[1])))


def prepare_actor_params(params, *, matmul_dtype=jnp.float32):
    """One-time padding/cast of weights (hoisted out of the per-call path).

    Returns (padded_params, action_dim). Zero-padded rows/cols/biases keep the
    math exact: padded hidden lanes are relu(0) = 0 and hit zero weight rows.
    """
    w1, b1, w2, b2, w3, b3 = params
    state_dim = w1.shape[0]
    H1 = _round_up(w1.shape[1], 128)        # 400 -> 512
    H2 = _round_up(w2.shape[1], 128)        # 300 -> 384
    AP = _round_up(w3.shape[1], 128)        # 4   -> 128
    action_dim = w3.shape[1]

    w1p = _pad2d(w1.astype(jnp.float32), state_dim, H1).astype(matmul_dtype)
    w2p = _pad2d(w2.astype(jnp.float32), H1, H2).astype(matmul_dtype)
    w3p = _pad2d(w3.astype(jnp.float32), H2, AP).astype(matmul_dtype)
    b1p = _pad2d(b1.astype(jnp.float32), 1, H1)   # biases stay f32
    b2p = _pad2d(b2.astype(jnp.float32), 1, H2)
    b3p = _pad2d(b3.astype(jnp.float32), 1, AP)

    padded = tuple(jax.block_until_ready(p)
                   for p in (w1p, b1p, w2p, b2p, w3p, b3p))
    return padded, action_dim


def _choose_tiling(batch, tile_batch):
    """Pick (TB, num_tiles, batch_p).

    - TB capped at tile_batch (default 1024) and rounded to 8 rows.
    - >=2 tiles (and an even count) whenever the batch allows it, so v7x's
      second TensorCore is used under dimension_semantics=("parallel",).
    """
    batch_8 = _round_up(batch, 8)
    num_tiles = max(1, (batch_8 + tile_batch - 1) // tile_batch)
    if num_tiles == 1 and batch_8 >= 16:
        num_tiles = 2
    if num_tiles > 1 and num_tiles % 2 == 1:
        num_tiles += 1
    tb = _round_up(-(-batch_8 // num_tiles), 8)
    batch_p = tb * num_tiles
    return tb, num_tiles, batch_p


@functools.partial(jax.jit,
                   static_argnames=("max_action", "tile_batch", "action_dim"))
def _actor_forward_jit(x, w1p, b1p, w2p, b2p, w3p, b3p, *,
                       max_action, tile_batch, action_dim):
    batch, state_dim = x.shape
    H1 = w1p.shape[1]
    H2 = w2p.shape[1]
    AP = w3p.shape[1]
    mm_dtype = w1p.dtype

    TB, num_tiles, batch_p = _choose_tiling(batch, tile_batch)
    x_p = jnp.pad(x.astype(mm_dtype), ((0, batch_p - batch), (0, 0)))

    kernel = functools.partial(_actor_kernel, max_action=float(max_action))

    # Weights/biases: resident whole-array VMEM operands (not pipelined).
    wspec = pl.BlockSpec(memory_space=pltpu.MemorySpace.VMEM)

    flops = 2 * batch_p * (state_dim * H1 + H1 * H2 + H2 * AP)
    weight_bytes = sum(int(p.size) * p.dtype.itemsize
                       for p in (w1p, b1p, w2p, b2p, w3p, b3p))
    cost = pl.CostEstimate(
        flops=flops,
        transcendentals=batch_p * AP,
        bytes_accessed=int(x_p.size) * x_p.dtype.itemsize
        + weight_bytes + 4 * batch_p * AP,
    )

    out_padded = pl.pallas_call(
        kernel,
        out_shape=jax.ShapeDtypeStruct((batch_p, AP), jnp.int32),
        grid=(num_tiles,),
        in_specs=[
            pl.BlockSpec((TB, state_dim), lambda i: (i, 0)),  # pipelined x tile
            wspec, wspec, wspec, wspec, wspec, wspec,          # resident weights
        ],
        out_specs=pl.BlockSpec((TB, AP), lambda i: (i, 0)),    # lane-dense store
        compiler_params=pltpu.CompilerParams(
            dimension_semantics=("parallel",),                  # megacore on v7x
        ),
        cost_estimate=cost,
    )(x_p, w1p, b1p, w2p, b2p, w3p, b3p)

    # Strip batch and lane padding back to the logical shape.
    return out_padded[:batch, :action_dim]


def actor_forward(x, prepared_params, action_dim, max_action, *,
                  tile_batch=1024):
    """Fused Actor forward. `prepared_params` from prepare_actor_params()."""
    return _actor_forward_jit(x, *prepared_params,
                              max_action=float(max_action),
                              tile_batch=int(tile_batch),
                              action_dim=int(action_dim))


def init_actor_params(key, state_dim, action_dim):
    """Deterministic synthetic parameters (shapes match nn.Linear in Actor)."""
    k1, k2, k3, k4, k5, k6 = jax.random.split(key, 6)
    scale = 0.1
    w1 = scale * jax.random.normal(k1, (state_dim, 400), jnp.float32)
    b1 = scale * jax.random.normal(k2, (1, 400), jnp.float32)
    w2 = scale * jax.random.normal(k3, (400, 300), jnp.float32)
    b2 = scale * jax.random.normal(k4, (1, 300), jnp.float32)
    w3 = scale * jax.random.normal(k5, (300, action_dim), jnp.float32)
    b3 = scale * jax.random.normal(k6, (1, action_dim), jnp.float32)
    return (w1, b1, w2, b2, w3, b3)


def actor_reference(x, params, max_action):
    """Pure-JAX reference for correctness checking."""
    w1, b1, w2, b2, w3, b3 = params
    h1 = jnp.maximum(x @ w1 + b1, 0.0)
    h2 = jnp.maximum(h1 @ w2 + b2, 0.0)
    a = jnp.tanh(h2 @ w3 + b3) * max_action
    return jnp.round(a).astype(jnp.int32)


if __name__ == "__main__":
    key = jax.random.PRNGKey(0)
    kx, kp = jax.random.split(key)

    batch = 2
    state_dim = 16
    action_dim = 4
    max_action = 2.0

    x = jax.random.normal(kx, (batch, state_dim), jnp.float32)
    params = init_actor_params(kp, state_dim, action_dim)
    ref = actor_reference(x, params, max_action)

    # --- f32 matmul path: bit-exact with the f32 reference. -----------------
    prepared_f32, adim = prepare_actor_params(params,
                                              matmul_dtype=jnp.float32)
    out = actor_forward(x, prepared_f32, adim, max_action)
    out = jax.block_until_ready(out)
    assert out.shape == (batch, action_dim)
    assert out.dtype == jnp.int32
    assert jnp.array_equal(out, ref), (out, ref)

    # --- bf16 matmul fast path: allow +/-1 from round() boundary flips. -----
    prepared_bf16, _ = prepare_actor_params(params,
                                            matmul_dtype=jnp.bfloat16)
    out_bf16 = actor_forward(x, prepared_bf16, adim, max_action)
    out_bf16 = jax.block_until_ready(out_bf16)
    assert out_bf16.shape == (batch, action_dim)
    assert out_bf16.dtype == jnp.int32
    assert int(jnp.max(jnp.abs(out_bf16 - ref))) <= 1, (out_bf16, ref)

    print("KERNEL_OK")
</pallas_src>

<mosaic_0001>
module attributes {stable_mosaic.version = 11 : i64} {
  func.func @_actor_kernel(%arg0: i32, %arg1: memref<8x16xf32, #tpu.memory_space<vmem>>, %arg2: memref<16x512xf32, #tpu.memory_space<vmem>>, %arg3: memref<1x512xf32, #tpu.memory_space<vmem>>, %arg4: memref<512x384xf32, #tpu.memory_space<vmem>>, %arg5: memref<1x384xf32, #tpu.memory_space<vmem>>, %arg6: memref<384x128xf32, #tpu.memory_space<vmem>>, %arg7: memref<1x128xf32, #tpu.memory_space<vmem>>, %arg8: memref<8x128xi32, #tpu.memory_space<vmem>>) attributes {dimension_semantics = [#tpu.dimension_semantics<parallel>], iteration_bounds = array<i64: 1>, scalar_prefetch = 0 : i64, scratch_operands = 0 : i64, tpu.core_type = #tpu.core_type<tc>, window_params = [{transform_indices = @transform_0, window_bounds = array<i64: 8, 16>}, {pipeline_mode = #tpu.pipeline_mode<synchronous>, transform_indices = @transform_1, window_bounds = array<i64: 16, 512>}, {pipeline_mode = #tpu.pipeline_mode<synchronous>, transform_indices = @transform_2, window_bounds = array<i64: 1, 512>}, {pipeline_mode = #tpu.pipeline_mode<synchronous>, transform_indices = @transform_3, window_bounds = array<i64: 512, 384>}, {pipeline_mode = #tpu.pipeline_mode<synchronous>, transform_indices = @transform_4, window_bounds = array<i64: 1, 384>}, {pipeline_mode = #tpu.pipeline_mode<synchronous>, transform_indices = @transform_5, window_bounds = array<i64: 384, 128>}, {pipeline_mode = #tpu.pipeline_mode<synchronous>, transform_indices = @transform_6, window_bounds = array<i64: 1, 128>}, {transform_indices = @transform_7, window_bounds = array<i64: 8, 128>}]} {
    %c0 = arith.constant 0 : index
    %c0_0 = arith.constant 0 : index
    %0 = vector.load %arg1[%c0, %c0_0] : memref<8x16xf32, #tpu.memory_space<vmem>>, vector<8x16xf32>
    %c0_1 = arith.constant 0 : index
    %c0_2 = arith.constant 0 : index
    %1 = vector.load %arg2[%c0_1, %c0_2] : memref<16x512xf32, #tpu.memory_space<vmem>>, vector<16x512xf32>
    %cst = arith.constant dense<0.000000e+00> : vector<8x512xf32>
    %2 = tpu.matmul %0, %1, %cst {dimension_numbers = #tpu.dot_dimension_numbers<[1], [0], [0], [1], [0, 0, 1, 1], [], []>} : vector<8x16xf32>, vector<16x512xf32>, vector<8x512xf32> -> vector<8x512xf32>
    %c0_3 = arith.constant 0 : index
    %c0_4 = arith.constant 0 : index
    %3 = vector.load %arg3[%c0_3, %c0_4] : memref<1x512xf32, #tpu.memory_space<vmem>>, vector<1x512xf32>
    %4 = vector.broadcast %3 : vector<1x512xf32> to vector<8x512xf32>
    %5 = arith.addf %2, %4 : vector<8x512xf32>
    %cst_5 = arith.constant 0.000000e+00 : f32
    %6 = vector.broadcast %cst_5 : f32 to vector<8x512xf32>
    %7 = arith.maximumf %5, %6 : vector<8x512xf32>
    %c0_6 = arith.constant 0 : index
    %c0_7 = arith.constant 0 : index
    %8 = vector.load %arg4[%c0_6, %c0_7] : memref<512x384xf32, #tpu.memory_space<vmem>>, vector<512x384xf32>
    %cst_8 = arith.constant dense<0.000000e+00> : vector<8x384xf32>
    %9 = tpu.matmul %7, %8, %cst_8 {dimension_numbers = #tpu.dot_dimension_numbers<[1], [0], [0], [1], [0, 0, 1, 1], [], []>} : vector<8x512xf32>, vector<512x384xf32>, vector<8x384xf32> -> vector<8x384xf32>
    %c0_9 = arith.constant 0 : index
    %c0_10 = arith.constant 0 : index
    %10 = vector.load %arg5[%c0_9, %c0_10] : memref<1x384xf32, #tpu.memory_space<vmem>>, vector<1x384xf32>
    %11 = vector.broadcast %10 : vector<1x384xf32> to vector<8x384xf32>
    %12 = arith.addf %9, %11 : vector<8x384xf32>
    %cst_11 = arith.constant 0.000000e+00 : f32
    %13 = vector.broadcast %cst_11 : f32 to vector<8x384xf32>
    %14 = arith.maximumf %12, %13 : vector<8x384xf32>
    %c0_12 = arith.constant 0 : index
    %c0_13 = arith.constant 0 : index
    %15 = vector.load %arg6[%c0_12, %c0_13] : memref<384x128xf32, #tpu.memory_space<vmem>>, vector<384x128xf32>
    %cst_14 = arith.constant dense<0.000000e+00> : vector<8x128xf32>
    %16 = tpu.matmul %14, %15, %cst_14 {dimension_numbers = #tpu.dot_dimension_numbers<[1], [0], [0], [1], [0, 0, 1, 1], [], []>} : vector<8x384xf32>, vector<384x128xf32>, vector<8x128xf32> -> vector<8x128xf32>
    %c0_15 = arith.constant 0 : index
    %c0_16 = arith.constant 0 : index
    %17 = vector.load %arg7[%c0_15, %c0_16] : memref<1x128xf32, #tpu.memory_space<vmem>>, vector<1x128xf32>
    %18 = vector.broadcast %17 : vector<1x128xf32> to vector<8x128xf32>
    %19 = arith.addf %16, %18 : vector<8x128xf32>
    %20 = math.tanh %19 : vector<8x128xf32>
    %cst_17 = arith.constant 2.000000e+00 : f32
    %21 = vector.broadcast %cst_17 : f32 to vector<8x128xf32>
    %22 = arith.mulf %20, %21 : vector<8x128xf32>
    %23 = math.roundeven %22 : vector<8x128xf32>
    %24 = arith.fptosi %23 : vector<8x128xf32> to vector<8x128xi32>
    %c0_18 = arith.constant 0 : index
    %c0_19 = arith.constant 0 : index
    %25 = vector.load %arg8[%c0_18, %c0_19] : memref<8x128xi32, #tpu.memory_space<vmem>>, vector<8x128xi32>
    tpu.vector_store %arg8[%c0_18, %c0_19], %24 {strides = array<i32>} : memref<8x128xi32, #tpu.memory_space<vmem>>, vector<8x128xi32>,
    return
  }
  func.func @transform_0(%arg0: i32) -> (i32, i32) {
    %c0_i32 = arith.constant 0 : i32
    %c0_i32_0 = arith.constant 0 : i32
    return %arg0, %c0_i32 : i32, i32
  }
  func.func @transform_1(%arg0: i32) -> (i32, i32) {
    %c0_i32 = arith.constant 0 : i32
    %c0_i32_0 = arith.constant 0 : i32
    %c0_i32_1 = arith.constant 0 : i32
    return %c0_i32, %c0_i32_0 : i32, i32
  }
  func.func @transform_2(%arg0: i32) -> (i32, i32) {
    %c0_i32 = arith.constant 0 : i32
    %c0_i32_0 = arith.constant 0 : i32
    %c0_i32_1 = arith.constant 0 : i32
    return %c0_i32, %c0_i32_0 : i32, i32
  }
  func.func @transform_3(%arg0: i32) -> (i32, i32) {
    %c0_i32 = arith.constant 0 : i32
    %c0_i32_0 = arith.constant 0 : i32
    %c0_i32_1 = arith.constant 0 : i32
    return %c0_i32, %c0_i32_0 : i32, i32
  }
  func.func @transform_4(%arg0: i32) -> (i32, i32) {
    %c0_i32 = arith.constant 0 : i32
    %c0_i32_0 = arith.constant 0 : i32
    %c0_i32_1 = arith.constant 0 : i32
    return %c0_i32, %c0_i32_0 : i32, i32
  }
  func.func @transform_5(%arg0: i32) -> (i32, i32) {
    %c0_i32 = arith.constant 0 : i32
    %c0_i32_0 = arith.constant 0 : i32
    %c0_i32_1 = arith.constant 0 : i32
    return %c0_i32, %c0_i32_0 : i32, i32
  }
  func.func @transform_6(%arg0: i32) -> (i32, i32) {
    %c0_i32 = arith.constant 0 : i32
    %c0_i32_0 = arith.constant 0 : i32
    %c0_i32_1 = arith.constant 0 : i32
    return %c0_i32, %c0_i32_0 : i32, i32
  }
  func.func @transform_7(%arg0: i32) -> (i32, i32) {
    %c0_i32 = arith.constant 0 : i32
    %c0_i32_0 = arith.constant 0 : i32
    return %arg0, %c0_i32 : i32, i32
  }
}

</mosaic_0001>

<llo_original>
// kernel: _actor_forward_jit.1
$region0: #{_actor_forward_jit.1}
  #allocation0 [shape = 'u32[]', space=smem, size = 0x4, offset = 0x4, fixed_abs, tag = 'smem constant byte address 0x4 - core index']
  #allocation1 [shape = 'u32[144,128]{1,0:T(1,128)}', space=vmem, size = 0x12000, scoped, tag = 'internal scratch']
  %s0 = inlined_call_operand.vmem [shape: f32[8,16], index: 0, kind: input, shape index: {}]
  %s1 = inlined_call_operand.hbm [shape: f32[16,512], index: 1, kind: input, shape index: {}]
  %s2 = inlined_call_operand.vmem [shape: f32[1,512], index: 2, kind: input, shape index: {}]
  %s3 = inlined_call_operand.hbm [shape: f32[512,384], index: 3, kind: input, shape index: {}]
  %s4 = inlined_call_operand.vmem [shape: f32[1,384], index: 4, kind: input, shape index: {}]
  %s5 = inlined_call_operand.hbm [shape: f32[384,128], index: 5, kind: input, shape index: {}]
  %s6 = inlined_call_operand.vmem [shape: f32[1,128], index: 6, kind: input, shape index: {}]
  %s7 = inlined_call_operand.vmem [shape: s32[8,128], index: 7, kind: output, shape index: {}]
  %s8 = sld [smem:[#allocation0]]
  $region50: #{_actor_forward_jit.1} parent=0
    _
  %s10 = ssub.s32 1, %s8
  %s11 = scalar_select 0, %s10, %s8
  $region1: #{_actor_forward_jit.1} parent=0
    #allocation2 [shape = 'u8[32768]{0}', space=vmem, size = 0x8000, scoped, tag = 'input window, operand 1, single buffered']
    #allocation3 [shape = 's32[1]{0}', space=sflag, size = 0x4, scoped, tag = 'scoped memory for _actor_forward_jit.1']
    #allocation4 [shape = 'u8[786432]{0}', space=vmem, size = 0xc0000, scoped, tag = 'input window, operand 3, single buffered']
    #allocation5 [shape = 's32[1]{0}', space=sflag, size = 0x4, scoped, tag = 'scoped memory for _actor_forward_jit.1']
    #allocation6 [shape = 'u8[196608]{0}', space=vmem, size = 0x30000, scoped, tag = 'input window, operand 5, single buffered']
    %12 = vsyncpa [#allocation3], 0
    %13 = vsyncpa [#allocation5], 0
    // Predicated region
    $region2: #{_actor_forward_jit.1} parent=1 // pred_check
      _
    $region3: #{_actor_forward_jit.1} parent=1 // pred_check_branch
      %15 = sbr.rel (0) target = $region5
    $region4: #{_actor_forward_jit.1} parent=1 // pred_region
      _
    $region5: #{_actor_forward_jit.1} parent=1 // pred_fallthru
      _
    // Predicated region
    $region6: #{_actor_forward_jit.1} parent=1 // pred_check
      _
    $region7: #{_actor_forward_jit.1} parent=1 // pred_check_branch
      %17 = sbr.rel (0) target = $region9
    $region8: #{_actor_forward_jit.1} parent=1 // pred_region
      %s19 = ssub.s32 1024, 1024
      %20 = vsyncadd [#allocation3], %s19
      %s21 = sshll.u32 [#allocation2], 4
      %s22 = int_to_ptr.vmem [resolvable:$true] %s21
      %27 = dma.hbm_to_vmem [thread:$0]  %s1, 1024, %s22, [#allocation3], 512, 512, 32
    $region9: #{_actor_forward_jit.1} parent=1 // pred_fallthru
      _
    // Predicated region
    $region10: #{_actor_forward_jit.1} parent=1 // pred_check
      _
    $region11: #{_actor_forward_jit.1} parent=1 // pred_check_branch
      %29 = sbr.rel (0) target = $region13
    $region12: #{_actor_forward_jit.1} parent=1 // pred_region
      _
    $region13: #{_actor_forward_jit.1} parent=1 // pred_fallthru
      _
    // Predicated region
    $region14: #{_actor_forward_jit.1} parent=1 // pred_check
      _
    $region15: #{_actor_forward_jit.1} parent=1 // pred_check_branch
      %31 = sbr.rel (0) target = $region17
    $region16: #{_actor_forward_jit.1} parent=1 // pred_region
      %s33 = ssub.s32 24576, 24576
      %34 = vsyncadd [#allocation5], %s33
      %s35 = sshll.u32 [#allocation4], 4
      %s36 = int_to_ptr.vmem [resolvable:$true] %s35
      %41 = dma.hbm_to_vmem [thread:$0]  %s3, 24576, %s36, [#allocation5], 384, 384, 24
    $region17: #{_actor_forward_jit.1} parent=1 // pred_fallthru
      _
    // Predicated region
    $region18: #{_actor_forward_jit.1} parent=1 // pred_check
      _
    $region19: #{_actor_forward_jit.1} parent=1 // pred_check_branch
      %43 = sbr.rel (0) target = $region21
    $region20: #{_actor_forward_jit.1} parent=1 // pred_region
      _
    $region21: #{_actor_forward_jit.1} parent=1 // pred_fallthru
      _
    // Predicated region
    $region22: #{_actor_forward_jit.1} parent=1 // pred_check
      _
    $region23: #{_actor_forward_jit.1} parent=1 // pred_check_branch
      %45 = sbr.rel (0) target = $region25
    $region24: #{_actor_forward_jit.1} parent=1 // pred_region
      %s47 = ssub.s32 6144, 6144
      %48 = vsyncadd [#allocation5], %s47
      %s49 = sshll.u32 [#allocation6], 4
      %s50 = int_to_ptr.vmem [resolvable:$true] %s49
      %55 = dma.hbm_to_vmem [thread:$0]  %s5, 6144, %s50, [#allocation5], 128, 128, 8
    $region25: #{_actor_forward_jit.1} parent=1 // pred_fallthru
      _
    // Predicated region
    $region26: #{_actor_forward_jit.1} parent=1 // pred_check
      _
    $region27: #{_actor_forward_jit.1} parent=1 // pred_check_branch
      %57 = sbr.rel (0) target = $region29
    $region28: #{_actor_forward_jit.1} parent=1 // pred_region
      _
    $region29: #{_actor_forward_jit.1} parent=1 // pred_fallthru
      _
    // Predicated region
    $region30: #{_actor_forward_jit.1} parent=1 // pred_check
      _
    $region31: #{_actor_forward_jit.1} parent=1 // pred_check_branch
      %59 = sbr.rel (0) target = $region33
    $region32: #{_actor_forward_jit.1} parent=1 // pred_region
      %60 = dma.done [#allocation3], 1024
    $region33: #{_actor_forward_jit.1} parent=1 // pred_fallthru
      _
    // Predicated region
    $region34: #{_actor_forward_jit.1} parent=1 // pred_check
      _
    $region35: #{_actor_forward_jit.1} parent=1 // pred_check_branch
      %62 = sbr.rel (0) target = $region37
    $region36: #{_actor_forward_jit.1} parent=1 // pred_region
      %63 = dma.done [#allocation5], 24576
    $region37: #{_actor_forward_jit.1} parent=1 // pred_fallthru
      _
    // Predicated region
    $region38: #{_actor_forward_jit.1} parent=1 // pred_check
      _
    $region39: #{_actor_forward_jit.1} parent=1 // pred_check_branch
      %65 = sbr.rel (0) target = $region41
    $region40: #{_actor_forward_jit.1} parent=1 // pred_region
      %66 = dma.done [#allocation5], 6144
    $region41: #{_actor_forward_jit.1} parent=1 // pred_fallthru
      _
    %v67 = vld [vmem:[%s0] sm:$0xff]
    %v68 = vld [vmem:[#allocation2] sm:$0xff]
    %v69 = vld [vmem:[#allocation2 + $0x8] sm:$0xff]
    %v70 = vld [vmem:[#allocation2 + $0x10] sm:$0xff]
    %v71 = vld [vmem:[#allocation2 + $0x18] sm:$0xff]
    %v72 = vld [vmem:[#allocation2 + $0x20] sm:$0xff]
    %v73 = vld [vmem:[#allocation2 + $0x28] sm:$0xff]
    %v74 = vld [vmem:[#allocation2 + $0x30] sm:$0xff]
    %v75 = vld [vmem:[#allocation2 + $0x38] sm:$0xff]
    %v76 = vld [vmem:[%s2] sm:$0xf]
    %v78 = vlaneseq
    %v79 = vshrl.u32 %v78, 7
    %v80 = vsub.s32 0, %v79
    %v81 = vrot.slane %v76, %v80
    %v82 = vlaneseq
    %v83 = vshrl.u32 %v82, 7
    %v84 = vsub.s32 1, %v83
    %v85 = vrot.slane %v76, %v84
    %v86 = vlaneseq
    %v87 = vshrl.u32 %v86, 7
    %v88 = vsub.s32 2, %v87
    %v89 = vrot.slane %v76, %v88
    %v90 = vlaneseq
    %v91 = vshrl.u32 %v90, 7
    %v92 = vsub.s32 3, %v91
    %v93 = vrot.slane %v76, %v92
    %vm98 = vcmask 130048
    %v100 = vsel %vm98, %v67, 0
    %102 = vmatprep.subr.mxu0 %v69
    %103 = vmatpush1.msra.mxu0 %v68
    %104 = vmatprep.subr.mxu0 %v73
    %105 = vmatpush1.msra.mxu0 %v72
    %106 = vmatprep.subr.mxu0 0.0
    %107 = vmatpush1.msra.mxu0 0.0
    %108 = vmatprep.subr.mxu0 0.0
    %109 = vmatpush1.msra.mxu0 0.0
    %110 = vmatprep.subr.mxu0 0.0
    %111 = vmatpush1.msra.mxu0 0.0
    %112 = vmatprep.subr.mxu0 0.0
    %113 = vmatpush1.msra.mxu0 0.0
    %114 = vmatprep.subr.mxu0 0.0
    %115 = vmatpush1.msra.mxu0 0.0
    %116 = vmatprep.subr.mxu0 0.0
    %117 = vmatpush1.msra.mxu0 0.0
    %118 = vmatprep.subr.mxu0 0.0
    %119 = vmatpush1.msra.mxu0 0.0
    %120 = vmatprep.subr.mxu0 0.0
    %121 = vmatpush1.msra.mxu0 0.0
    %122 = vmatprep.subr.mxu0 0.0
    %123 = vmatpush1.msra.mxu0 0.0
    %124 = vmatprep.subr.mxu0 0.0
    %125 = vmatpush1.msra.mxu0 0.0
    %126 = vmatprep.subr.mxu0 0.0
    %127 = vmatpush1.msra.mxu0 0.0
    %128 = vmatprep.subr.mxu0 0.0
    %129 = vmatpush1.msra.mxu0 0.0
    %130 = vmatprep.subr.mxu0 0.0
    %131 = vmatpush1.msra.mxu0 0.0
    %132 = vmatprep.subr.mxu0 0.0
    %133 = vmatpush1.msra.mxu0 0.0
    %134 = vmatprep.subr.mxu0 0.0
    %135 = vmatpush1.msra.mxu0 0.0
    %136 = vmatprep.subr.mxu0 0.0
    %137 = vmatpush1.msra.mxu0 0.0
    %138 = vmatprep.subr.mxu0 0.0
    %139 = vmatpush1.msra.mxu0 0.0
    %140 = vmatprep.subr.mxu0 0.0
    %141 = vmatpush1.msra.mxu0 0.0
    %142 = vmatprep.subr.mxu0 0.0
    %143 = vmatpush1.msra.mxu0 0.0
    %144 = vmatprep.subr.mxu0 0.0
    %145 = vmatpush1.msra.mxu0 0.0
    %146 = vmatprep.subr.mxu0 0.0
    %147 = vmatpush1.msra.mxu0 0.0
    %148 = vmatprep.subr.mxu0 0.0
    %149 = vmatpush1.msra.mxu0 0.0
    %150 = vmatprep.subr.mxu0 0.0
    %151 = vmatpush1.msra.mxu0 0.0
    %152 = vmatprep.subr.mxu0 0.0
    %153 = vmatpush1.msra.mxu0 0.0
    %154 = vmatprep.subr.mxu0 0.0
    %155 = vmatpush1.msra.mxu0 0.0
    %156 = vmatprep.subr.mxu0 0.0
    %157 = vmatpush1.msra.mxu0 0.0
    %158 = vmatprep.subr.mxu0 0.0
    %159 = vmatpush1.msra.mxu0 0.0
    %160 = vmatprep.subr.mxu0 0.0
    %161 = vmatpush1.msra.mxu0 0.0
    %162 = vmatprep.subr.mxu0 0.0
    %163 = vmatpush1.msra.mxu0 0.0
    %164 = vmatprep.subr.mxu0 0.0
    %165 = vmatpush1.msra.mxu0 0.0
    %166 = vmatprep.mubr.f32.mxu0 0.0
    %167 = vmatmul.mubr.f32.gmra.mrb[0].mxu0 %v100
    %v168 = vpop.f32.mrb[0].mxu0
    %v169 = vadd.f32 %v81, %v168
    %v170 = vpop.f32.mrb[0].mxu0
    %v171 = vadd.f32 %v85, %v170
    %172 = vdwg.mxu0
    %173 = vmatprep.subr.mxu0 %v71
    %174 = vmatpush1.msra.mxu0 %v70
    %175 = vmatprep.subr.mxu0 %v75
    %176 = vmatpush1.msra.mxu0 %v74
    %177 = vmatprep.subr.mxu0 0.0
    %178 = vmatpush1.msra.mxu0 0.0
    %179 = vmatprep.subr.mxu0 0.0
    %180 = vmatpush1.msra.mxu0 0.0
    %181 = vmatprep.subr.mxu0 0.0
    %182 = vmatpush1.msra.mxu0 0.0
    %183 = vmatprep.subr.mxu0 0.0
    %184 = vmatpush1.msra.mxu0 0.0
    %185 = vmatprep.subr.mxu0 0.0
    %186 = vmatpush1.msra.mxu0 0.0
    %187 = vmatprep.subr.mxu0 0.0
    %188 = vmatpush1.msra.mxu0 0.0
    %189 = vmatprep.subr.mxu0 0.0
    %190 = vmatpush1.msra.mxu0 0.0
    %191 = vmatprep.subr.mxu0 0.0
    %192 = vmatpush1.msra.mxu0 0.0
    %193 = vmatprep.subr.mxu0 0.0
    %194 = vmatpush1.msra.mxu0 0.0
    %195 = vmatprep.subr.mxu0 0.0
    %196 = vmatpush1.msra.mxu0 0.0
    %197 = vmatprep.subr.mxu0 0.0
    %198 = vmatpush1.msra.mxu0 0.0
    %199 = vmatprep.subr.mxu0 0.0
    %200 = vmatpush1.msra.mxu0 0.0
    %201 = vmatprep.subr.mxu0 0.0
    %202 = vmatpush1.msra.mxu0 0.0
    %203 = vmatprep.subr.mxu0 0.0
    %204 = vmatpush1.msra.mxu0 0.0
    %205 = vmatprep.subr.mxu0 0.0
    %206 = vmatpush1.msra.mxu0 0.0
    %207 = vmatprep.subr.mxu0 0.0
    %208 = vmatpush1.msra.mxu0 0.0
    %209 = vmatprep.subr.mxu0 0.0
    %210 = vmatpush1.msra.mxu0 0.0
    %211 = vmatprep.subr.mxu0 0.0
    %212 = vmatpush1.msra.mxu0 0.0
    %213 = vmatprep.subr.mxu0 0.0
    %214 = vmatpush1.msra.mxu0 0.0
    %215 = vmatprep.subr.mxu0 0.0
    %216 = vmatpush1.msra.mxu0 0.0
    %217 = vmatprep.subr.mxu0 0.0
    %218 = vmatpush1.msra.mxu0 0.0
    %219 = vmatprep.subr.mxu0 0.0
    %220 = vmatpush1.msra.mxu0 0.0
    %221 = vmatprep.subr.mxu0 0.0
    %222 = vmatpush1.msra.mxu0 0.0
    %223 = vmatprep.subr.mxu0 0.0
    %224 = vmatpush1.msra.mxu0 0.0
    %225 = vmatprep.subr.mxu0 0.0
    %226 = vmatpush1.msra.mxu0 0.0
    %227 = vmatprep.subr.mxu0 0.0
    %228 = vmatpush1.msra.mxu0 0.0
    %229 = vmatprep.subr.mxu0 0.0
    %230 = vmatpush1.msra.mxu0 0.0
    %231 = vmatprep.subr.mxu0 0.0
    %232 = vmatpush1.msra.mxu0 0.0
    %233 = vmatprep.subr.mxu0 0.0
    %234 = vmatpush1.msra.mxu0 0.0
    %235 = vmatprep.subr.mxu0 0.0
    %236 = vmatpush1.msra.mxu0 0.0
    %237 = vmatprep.mubr.f32.mxu0 0.0
    %238 = vmatmul.mubr.f32.gmra.mrb[0].mxu0 %v100
    %v239 = vpop.f32.mrb[0].mxu0
    %v240 = vadd.f32 %v89, %v239
    %v241 = vpop.f32.mrb[0].mxu0
    %v242 = vadd.f32 %v93, %v241
    %243 = vdwg.mxu0
    %v244 = vmax.f32 %v169, 0.0
    %v245 = vmax.f32 %v171, 0.0
    %v246 = vmax.f32 %v240, 0.0
    %v247 = vmax.f32 %v242, 0.0
    %v248 = vld [vmem:[#allocation4] sm:$0xff]
    %v249 = vld [vmem:[#allocation4 + $0x8] sm:$0xff]
    %v250 = vld [vmem:[#allocation4 + $0x10] sm:$0xff]
    %v251 = vld [vmem:[#allocation4 + $0x18] sm:$0xff]
    %v252 = vld [vmem:[#allocation4 + $0x20] sm:$0xff]
    %v253 = vld [vmem:[#allocation4 + $0x28] sm:$0xff]
    %v254 = vld [vmem:[#allocation4 + $0x30] sm:$0xff]
    %v255 = vld [vmem:[#allocation4 + $0x38] sm:$0xff]
    %v256 = vld [vmem:[#allocation4 + $0x40] sm:$0xff]
    %v257 = vld [vmem:[#allocation4 + $0x48] sm:$0xff]
    %v258 = vld [vmem:[#allocation4 + $0x50] sm:$0xff]
    %v259 = vld [vmem:[#allocation4 + $0x58] sm:$0xff]
    %v260 = vld [vmem:[#allocation4 + $0x60] sm:$0xff]
    %v261 = vld [vmem:[#allocation4 + $0x68] sm:$0xff]
    %v262 = vld [vmem:[#allocation4 + $0x70] sm:$0xff]
    %v263 = vld [vmem:[#allocation4 + $0x78] sm:$0xff]
    %v264 = vld [vmem:[#allocation4 + $0x80] sm:$0xff]
    %v265 = vld [vmem:[#allocation4 + $0x88] sm:$0xff]
    %v266 = vld [vmem:[#allocation4 + $0x90] sm:$0xff]
    %v267 = vld [vmem:[#allocation4 + $0x98] sm:$0xff]
    %v268 = vld [vmem:[#allocation4 + $0xa0] sm:$0xff]
    %v269 = vld [vmem:[#allocation4 + $0xa8] sm:$0xff]
    %v270 = vld [vmem:[#allocation4 + $0xb0] sm:$0xff]
    %v271 = vld [vmem:[#allocation4 + $0xb8] sm:$0xff]
    %v272 = vld [vmem:[#allocation4 + $0xc0] sm:$0xff]
    %v273 = vld [vmem:[#allocation4 + $0xc8] sm:$0xff]
    %v274 = vld [vmem:[#allocation4 + $0xd0] sm:$0xff]
    %v275 = vld [vmem:[#allocation4 + $0xd8] sm:$0xff]
    %v276 = vld [vmem:[#allocation4 + $0xe0] sm:$0xff]
    %v277 = vld [vmem:[#allocation4 + $0xe8] sm:$0xff]
    %v278 = vld [vmem:[#allocation4 + $0xf0] sm:$0xff]
    %v279 = vld [vmem:[#allocation4 + $0xf8] sm:$0xff]
    %v280 = vld [vmem:[#allocation4 + $0x100] sm:$0xff]
    %v281 = vld [vmem:[#allocation4 + $0x108] sm:$0xff]
    %v282 = vld [vmem:[#allocation4 + $0x110] sm:$0xff]
    %v283 = vld [vmem:[#allocation4 + $0x118] sm:$0xff]
    %v284 = vld [vmem:[#allocation4 + $0x120] sm:$0xff]
    %v285 = vld [vmem:[#allocation4 + $0x128] sm:$0xff]
    %v286 = vld [vmem:[#allocation4 + $0x130] sm:$0xff]
    %v287 = vld [vmem:[#allocation4 + $0x138] sm:$0xff]
    %v288 = vld [vmem:[#allocation4 + $0x140] sm:$0xff]
    %v289 = vld [vmem:[#allocation4 + $0x148] sm:$0xff]
    %v290 = vld [vmem:[#allocation4 + $0x150] sm:$0xff]
    %v291 = vld [vmem:[#allocation4 + $0x158] sm:$0xff]
    %v292 = vld [vmem:[#allocation4 + $0x160] sm:$0xff]
    %v293 = vld [vmem:[#allocation4 + $0x168] sm:$0xff]
    %v294 = vld [vmem:[#allocation4 + $0x170] sm:$0xff]
    %v295 = vld [vmem:[#allocation4 + $0x178] sm:$0xff]
    %v296 = vld [vmem:[#allocation4 + $0x180] sm:$0xff]
    %v297 = vld [vmem:[#allocation4 + $0x188] sm:$0xff]
    %v298 = vld [vmem:[#allocation4 + $0x190] sm:$0xff]
    %v299 = vld [vmem:[#allocation4 + $0x198] sm:$0xff]
    %v300 = vld [vmem:[#allocation4 + $0x1a0] sm:$0xff]
    %v301 = vld [vmem:[#allocation4 + $0x1a8] sm:$0xff]
    %v302 = vld [vmem:[#allocation4 + $0x1b0] sm:$0xff]
    %v303 = vld [vmem:[#allocation4 + $0x1b8] sm:$0xff]
    %v304 = vld [vmem:[#allocation4 + $0x1c0] sm:$0xff]
    %v305 = vld [vmem:[#allocation4 + $0x1c8] sm:$0xff]
    %v306 = vld [vmem:[#allocation4 + $0x1d0] sm:$0xff]
    %v307 = vld [vmem:[#allocation4 + $0x1d8] sm:$0xff]
    %v308 = vld [vmem:[#allocation4 + $0x1e0] sm:$0xff]
    %v309 = vld [vmem:[#allocation4 + $0x1e8] sm:$0xff]
    %v310 = vld [vmem:[#allocation4 + $0x1f0] sm:$0xff]
    %v311 = vld [vmem:[#allocation4 + $0x1f8] sm:$0xff]
    %v312 = vld [vmem:[#allocation4 + $0x200] sm:$0xff]
    %v313 = vld [vmem:[#allocation4 + $0x208] sm:$0xff]
    %v314 = vld [vmem:[#allocation4 + $0x210] sm:$0xff]
    %v315 = vld [vmem:[#allocation4 + $0x218] sm:$0xff]
    %v316 = vld [vmem:[#allocation4 + $0x220] sm:$0xff]
    %v317 = vld [vmem:[#allocation4 + $0x228] sm:$0xff]
    %v318 = vld [vmem:[#allocation4 + $0x230] sm:$0xff]
    %v319 = vld [vmem:[#allocation4 + $0x238] sm:$0xff]
    %v320 = vld [vmem:[#allocation4 + $0x240] sm:$0xff]
    %v321 = vld [vmem:[#allocation4 + $0x248] sm:$0xff]
    %v322 = vld [vmem:[#allocation4 + $0x250] sm:$0xff]
    %v323 = vld [vmem:[#allocation4 + $0x258] sm:$0xff]
    %v324 = vld [vmem:[#allocation4 + $0x260] sm:$0xff]
    %v325 = vld [vmem:[#allocation4 + $0x268] sm:$0xff]
    %v326 = vld [vmem:[#allocation4 + $0x270] sm:$0xff]
    %v327 = vld [vmem:[#allocation4 + $0x278] sm:$0xff]
    %v328 = vld [vmem:[#allocation4 + $0x280] sm:$0xff]
    %v329 = vld [vmem:[#allocation4 + $0x288] sm:$0xff]
    %v330 = vld [vmem:[#allocation4 + $0x290] sm:$0xff]
    %v331 = vld [vmem:[#allocation4 + $0x298] sm:$0xff]
    %v332 = vld [vmem:[#allocation4 + $0x2a0] sm:$0xff]
    %v333 = vld [vmem:[#allocation4 + $0x2a8] sm:$0xff]
    %v334 = vld [vmem:[#allocation4 + $0x2b0] sm:$0xff]
    %v335 = vld [vmem:[#allocation4 + $0x2b8] sm:$0xff]
    %v336 = vld [vmem:[#allocation4 + $0x2c0] sm:$0xff]
    %v337 = vld [vmem:[#allocation4 + $0x2c8] sm:$0xff]
    %v338 = vld [vmem:[#allocation4 + $0x2d0] sm:$0xff]
    %v339 = vld [vmem:[#allocation4 + $0x2d8] sm:$0xff]
    %v340 = vld [vmem:[#allocation4 + $0x2e0] sm:$0xff]
    %v341 = vld [vmem:[#allocation4 + $0x2e8] sm:$0xff]
    %v342 = vld [vmem:[#allocation4 + $0x2f0] sm:$0xff]
    %v343 = vld [vmem:[#allocation4 + $0x2f8] sm:$0xff]
    %v344 = vld [vmem:[#allocation4 + $0x300] sm:$0xff]
    %v345 = vld [vmem:[#allocation4 + $0x308] sm:$0xff]
    %v346 = vld [vmem:[#allocation4 + $0x310] sm:$0xff]
    %v347 = vld [vmem:[#allocation4 + $0x318] sm:$0xff]
    %v348 = vld [vmem:[#allocation4 + $0x320] sm:$0xff]
    %v349 = vld [vmem:[#allocation4 + $0x328] sm:$0xff]
    %v350 = vld [vmem:[#allocation4 + $0x330] sm:$0xff]
    %v351 = vld [vmem:[#allocation4 + $0x338] sm:$0xff]
    %v352 = vld [vmem:[#allocation4 + $0x340] sm:$0xff]
    %v353 = vld [vmem:[#allocation4 + $0x348] sm:$0xff]
    %v354 = vld [vmem:[#allocation4 + $0x350] sm:$0xff]
    %v355 = vld [vmem:[#allocation4 + $0x358] sm:$0xff]
    %v356 = vld [vmem:[#allocation4 + $0x360] sm:$0xff]
    %v357 = vld [vmem:[#allocation4 + $0x368] sm:$0xff]
    %v358 = vld [vmem:[#allocation4 + $0x370] sm:$0xff]
    %v359 = vld [vmem:[#allocation4 + $0x378] sm:$0xff]
    %v360 = vld [vmem:[#allocation4 + $0x380] sm:$0xff]
    %v361 = vld [vmem:[#allocation4 + $0x388] sm:$0xff]
    %v362 = vld [vmem:[#allocation4 + $0x390] sm:$0xff]
    %v363 = vld [vmem:[#allocation4 + $0x398] sm:$0xff]
    %v364 = vld [vmem:[#allocation4 + $0x3a0] sm:$0xff]
    %v365 = vld [vmem:[#allocation4 + $0x3a8] sm:$0xff]
    %v366 = vld [vmem:[#allocation4 + $0x3b0] sm:$0xff]
    %v367 = vld [vmem:[#allocation4 + $0x3b8] sm:$0xff]
    %v368 = vld [vmem:[#allocation4 + $0x3c0] sm:$0xff]
    %v369 = vld [vmem:[#allocation4 + $0x3c8] sm:$0xff]
    %v370 = vld [vmem:[#allocation4 + $0x3d0] sm:$0xff]
    %v371 = vld [vmem:[#allocation4 + $0x3d8] sm:$0xff]
    %v372 = vld [vmem:[#allocation4 + $0x3e0] sm:$0xff]
    %v373 = vld [vmem:[#allocation4 + $0x3e8] sm:$0xff]
    %v374 = vld [vmem:[#allocation4 + $0x3f0] sm:$0xff]
    %v375 = vld [vmem:[#allocation4 + $0x3f8] sm:$0xff]
    %v376 = vld [vmem:[#allocation4 + $0x400] sm:$0xff]
    %v377 = vld [vmem:[#allocation4 + $0x408] sm:$0xff]
    %v378 = vld [vmem:[#allocation4 + $0x410] sm:$0xff]
    %v379 = vld [vmem:[#allocation4 + $0x418] sm:$0xff]
    %v380 = vld [vmem:[#allocation4 + $0x420] sm:$0xff]
    %v381 = vld [vmem:[#allocation4 + $0x428] sm:$0xff]
    %v382 = vld [vmem:[#allocation4 + $0x430] sm:$0xff]
    %v383 = vld [vmem:[#allocation4 + $0x438] sm:$0xff]
    %v384 = vld [vmem:[#allocation4 + $0x440] sm:$0xff]
    %v385 = vld [vmem:[#allocation4 + $0x448] sm:$0xff]
    %v386 = vld [vmem:[#allocation4 + $0x450] sm:$0xff]
    %v387 = vld [vmem:[#allocation4 + $0x458] sm:$0xff]
    %v388 = vld [vmem:[#allocation4 + $0x460] sm:$0xff]
    %v389 = vld [vmem:[#allocation4 + $0x468] sm:$0xff]
    %v390 = vld [vmem:[#allocation4 + $0x470] sm:$0xff]
    %v391 = vld [vmem:[#allocation4 + $0x478] sm:$0xff]
    %v392 = vld [vmem:[#allocation4 + $0x480] sm:$0xff]
    %v393 = vld [vmem:[#allocation4 + $0x488] sm:$0xff]
    %v394 = vld [vmem:[#allocation4 + $0x490] sm:$0xff]
    %v395 = vld [vmem:[#allocation4 + $0x498] sm:$0xff]
    %v396 = vld [vmem:[#allocation4 + $0x4a0] sm:$0xff]
    %v397 = vld [vmem:[#allocation4 + $0x4a8] sm:$0xff]
    %v398 = vld [vmem:[#allocation4 + $0x4b0] sm:$0xff]
    %v399 = vld [vmem:[#allocation4 + $0x4b8] sm:$0xff]
    %v400 = vld [vmem:[#allocation4 + $0x4c0] sm:$0xff]
    %v401 = vld [vmem:[#allocation4 + $0x4c8] sm:$0xff]
    %v402 = vld [vmem:[#allocation4 + $0x4d0] sm:$0xff]
    %v403 = vld [vmem:[#allocation4 + $0x4d8] sm:$0xff]
    %v404 = vld [vmem:[#allocation4 + $0x4e0] sm:$0xff]
    %v405 = vld [vmem:[#allocation4 + $0x4e8] sm:$0xff]
    %v406 = vld [vmem:[#allocation4 + $0x4f0] sm:$0xff]
    %v407 = vld [vmem:[#allocation4 + $0x4f8] sm:$0xff]
    %v408 = vld [vmem:[#allocation4 + $0x500] sm:$0xff]
    %v409 = vld [vmem:[#allocation4 + $0x508] sm:$0xff]
    %v410 = vld [vmem:[#allocation4 + $0x510] sm:$0xff]
    %v411 = vld [vmem:[#allocation4 + $0x518] sm:$0xff]
    %v412 = vld [vmem:[#allocation4 + $0x520] sm:$0xff]
    %v413 = vld [vmem:[#allocation4 + $0x528] sm:$0xff]
    %v414 = vld [vmem:[#allocation4 + $0x530] sm:$0xff]
    %v415 = vld [vmem:[#allocation4 + $0x538] sm:$0xff]
    %v416 = vld [vmem:[#allocation4 + $0x540] sm:$0xff]
    %v417 = vld [vmem:[#allocation4 + $0x548] sm:$0xff]
    %v418 = vld [vmem:[#allocation4 + $0x550] sm:$0xff]
    %v419 = vld [vmem:[#allocation4 + $0x558] sm:$0xff]
    %v420 = vld [vmem:[#allocation4 + $0x560] sm:$0xff]
    %v421 = vld [vmem:[#allocation4 + $0x568] sm:$0xff]
    %v422 = vld [vmem:[#allocation4 + $0x570] sm:$0xff]
    %v423 = vld [vmem:[#allocation4 + $0x578] sm:$0xff]
    %v424 = vld [vmem:[#allocation4 + $0x580] sm:$0xff]
    %v425 = vld [vmem:[#allocation4 + $0x588] sm:$0xff]
    %v426 = vld [vmem:[#allocation4 + $0x590] sm:$0xff]
    %v427 = vld [vmem:[#allocation4 + $0x598] sm:$0xff]
    %v428 = vld [vmem:[#allocation4 + $0x5a0] sm:$0xff]
    %v429 = vld [vmem:[#allocation4 + $0x5a8] sm:$0xff]
    %v430 = vld [vmem:[#allocation4 + $0x5b0] sm:$0xff]
    %v431 = vld [vmem:[#allocation4 + $0x5b8] sm:$0xff]
    %v432 = vld [vmem:[#allocation4 + $0x5c0] sm:$0xff]
    %v433 = vld [vmem:[#allocation4 + $0x5c8] sm:$0xff]
    %v434 = vld [vmem:[#allocation4 + $0x5d0] sm:$0xff]
    %v435 = vld [vmem:[#allocation4 + $0x5d8] sm:$0xff]
    %v436 = vld [vmem:[#allocation4 + $0x5e0] sm:$0xff]
    %v437 = vld [vmem:[#allocation4 + $0x5e8] sm:$0xff]
    %v438 = vld [vmem:[#allocation4 + $0x5f0] sm:$0xff]
    %v439 = vld [vmem:[#allocation4 + $0x5f8] sm:$0xff]
    %v440 = vld [vmem:[%s4] sm:$0x7]
    %v442 = vlaneseq
    %v443 = vshrl.u32 %v442, 7
    %v444 = vsub.s32 0, %v443
    %v445 = vrot.slane %v440, %v444
    %v446 = vlaneseq
    %v447 = vshrl.u32 %v446, 7
    %v448 = vsub.s32 1, %v447
    %v449 = vrot.slane %v440, %v448
    %v450 = vlaneseq
    %v451 = vshrl.u32 %v450, 7
    %v452 = vsub.s32 2, %v451
    %v453 = vrot.slane %v440, %v452
    %457 = vmatprep.subr.mxu0 %v249
    %458 = vmatpush1.msra.mxu0 %v248
    %459 = vmatprep.subr.mxu0 %v252
    %460 = vmatpush1.msra.mxu0 %v251
    %461 = vmatprep.subr.mxu0 %v255
    %462 = vmatpush1.msra.mxu0 %v254
    %463 = vmatprep.subr.mxu0 %v258
    %464 = vmatpush1.msra.mxu0 %v257
    %465 = vmatprep.subr.mxu0 %v261
    %466 = vmatpush1.msra.mxu0 %v260
    %467 = vmatprep.subr.mxu0 %v264
    %468 = vmatpush1.msra.mxu0 %v263
    %469 = vmatprep.subr.mxu0 %v267
    %470 = vmatpush1.msra.mxu0 %v266
    %471 = vmatprep.subr.mxu0 %v270
    %472 = vmatpush1.msra.mxu0 %v269
    %473 = vmatprep.subr.mxu0 %v273
    %474 = vmatpush1.msra.mxu0 %v272
    %475 = vmatprep.subr.mxu0 %v276
    %476 = vmatpush1.msra.mxu0 %v275
    %477 = vmatprep.subr.mxu0 %v279
    %478 = vmatpush1.msra.mxu0 %v278
    %479 = vmatprep.subr.mxu0 %v282
    %480 = vmatpush1.msra.mxu0 %v281
    %481 = vmatprep.subr.mxu0 %v285
    %482 = vmatpush1.msra.mxu0 %v284
    %483 = vmatprep.subr.mxu0 %v288
    %484 = vmatpush1.msra.mxu0 %v287
    %485 = vmatprep.subr.mxu0 %v291
    %486 = vmatpush1.msra.mxu0 %v290
    %487 = vmatprep.subr.mxu0 %v294
    %488 = vmatpush1.msra.mxu0 %v293
    %489 = vmatprep.subr.mxu0 %v297
    %490 = vmatpush1.msra.mxu0 %v296
    %491 = vmatprep.subr.mxu0 %v300
    %492 = vmatpush1.msra.mxu0 %v299
    %493 = vmatprep.subr.mxu0 %v303
    %494 = vmatpush1.msra.mxu0 %v302
    %495 = vmatprep.subr.mxu0 %v306
    %496 = vmatpush1.msra.mxu0 %v305
    %497 = vmatprep.subr.mxu0 %v309
    %498 = vmatpush1.msra.mxu0 %v308
    %499 = vmatprep.subr.mxu0 %v312
    %500 = vmatpush1.msra.mxu0 %v311
    %501 = vmatprep.subr.mxu0 %v315
    %502 = vmatpush1.msra.mxu0 %v314
    %503 = vmatprep.subr.mxu0 %v318
    %504 = vmatpush1.msra.mxu0 %v317
    %505 = vmatprep.subr.mxu0 %v321
    %506 = vmatpush1.msra.mxu0 %v320
    %507 = vmatprep.subr.mxu0 %v324
    %508 = vmatpush1.msra.mxu0 %v323
    %509 = vmatprep.subr.mxu0 %v327
    %510 = vmatpush1.msra.mxu0 %v326
    %511 = vmatprep.subr.mxu0 %v330
    %512 = vmatpush1.msra.mxu0 %v329
    %513 = vmatprep.subr.mxu0 %v333
    %514 = vmatpush1.msra.mxu0 %v332
    %515 = vmatprep.subr.mxu0 %v336
    %516 = vmatpush1.msra.mxu0 %v335
    %517 = vmatprep.subr.mxu0 %v339
    %518 = vmatpush1.msra.mxu0 %v338
    %519 = vmatprep.subr.mxu0 %v342
    %520 = vmatpush1.msra.mxu0 %v341
    %521 = vmatprep.mubr.f32.mxu0 %v245
    %522 = vmatmul.mubr.f32.gmra.mrb[0].mxu0 %v244
    %v523 = vpop.f32.mrb[0].mxu0
    %v524 = vadd.f32 %v445, %v523
    %v525 = vpop.f32.mrb[0].mxu0
    %v526 = vadd.f32 %v449, %v525
    %527 = vdwg.mxu0
    %528 = vmatprep.subr.mxu0 %v345
    %529 = vmatpush1.msra.mxu0 %v344
    %530 = vmatprep.subr.mxu0 %v348
    %531 = vmatpush1.msra.mxu0 %v347
    %532 = vmatprep.subr.mxu0 %v351
    %533 = vmatpush1.msra.mxu0 %v350
    %534 = vmatprep.subr.mxu0 %v354
    %535 = vmatpush1.msra.mxu0 %v353
    %536 = vmatprep.subr.mxu0 %v357
    %537 = vmatpush1.msra.mxu0 %v356
    %538 = vmatprep.subr.mxu0 %v360
    %539 = vmatpush1.msra.mxu0 %v359
    %540 = vmatprep.subr.mxu0 %v363
    %541 = vmatpush1.msra.mxu0 %v362
    %542 = vmatprep.subr.mxu0 %v366
    %543 = vmatpush1.msra.mxu0 %v365
    %544 = vmatprep.subr.mxu0 %v369
    %545 = vmatpush1.msra.mxu0 %v368
    %546 = vmatprep.subr.mxu0 %v372
    %547 = vmatpush1.msra.mxu0 %v371
    %548 = vmatprep.subr.mxu0 %v375
    %549 = vmatpush1.msra.mxu0 %v374
    %550 = vmatprep.subr.mxu0 %v378
    %551 = vmatpush1.msra.mxu0 %v377
    %552 = vmatprep.subr.mxu0 %v381
    %553 = vmatpush1.msra.mxu0 %v380
    %554 = vmatprep.subr.mxu0 %v384
    %555 = vmatpush1.msra.mxu0 %v383
    %556 = vmatprep.subr.mxu0 %v387
    %557 = vmatpush1.msra.mxu0 %v386
    %558 = vmatprep.subr.mxu0 %v390
    %559 = vmatpush1.msra.mxu0 %v389
    %560 = vmatprep.subr.mxu0 %v393
    %561 = vmatpush1.msra.mxu0 %v392
    %562 = vmatprep.subr.mxu0 %v396
    %563 = vmatpush1.msra.mxu0 %v395
    %564 = vmatprep.subr.mxu0 %v399
    %565 = vmatpush1.msra.mxu0 %v398
    %566 = vmatprep.subr.mxu0 %v402
    %567 = vmatpush1.msra.mxu0 %v401
    %568 = vmatprep.subr.mxu0 %v405
    %569 = vmatpush1.msra.mxu0 %v404
    %570 = vmatprep.subr.mxu0 %v408
    %571 = vmatpush1.msra.mxu0 %v407
    %572 = vmatprep.subr.mxu0 %v411
    %573 = vmatpush1.msra.mxu0 %v410
    %574 = vmatprep.subr.mxu0 %v414
    %575 = vmatpush1.msra.mxu0 %v413
    %576 = vmatprep.subr.mxu0 %v417
    %577 = vmatpush1.msra.mxu0 %v416
    %578 = vmatprep.subr.mxu0 %v420
    %579 = vmatpush1.msra.mxu0 %v419
    %580 = vmatprep.subr.mxu0 %v423
    %581 = vmatpush1.msra.mxu0 %v422
    %582 = vmatprep.subr.mxu0 %v426
    %583 = vmatpush1.msra.mxu0 %v425
    %584 = vmatprep.subr.mxu0 %v429
    %585 = vmatpush1.msra.mxu0 %v428
    %586 = vmatprep.subr.mxu0 %v432
    %587 = vmatpush1.msra.mxu0 %v431
    %588 = vmatprep.subr.mxu0 %v435
    %589 = vmatpush1.msra.mxu0 %v434
    %590 = vmatprep.subr.mxu0 %v438
    %591 = vmatpush1.msra.mxu0 %v437
    %592 = vmatprep.mubr.f32.mxu0 %v247
    %593 = vmatmul.mubr.f32.gmra.mrb[0].mxu0 %v246
    %v594 = vpop.f32.mrb[0].mxu0
    %v595 = vadd.f32 %v524, %v594
    %v596 = vpop.f32.mrb[0].mxu0
    %v597 = vadd.f32 %v526, %v596
    %598 = vdwg.mxu0
    %599 = vmatprep.subr.mxu0 0.0
    %600 = vmatpush1.msra.mxu0 %v250
    %601 = vmatprep.subr.mxu0 0.0
    %602 = vmatpush1.msra.mxu0 %v253
    %603 = vmatprep.subr.mxu0 0.0
    %604 = vmatpush1.msra.mxu0 %v256
    %605 = vmatprep.subr.mxu0 0.0
    %606 = vmatpush1.msra.mxu0 %v259
    %607 = vmatprep.subr.mxu0 0.0
    %608 = vmatpush1.msra.mxu0 %v262
    %609 = vmatprep.subr.mxu0 0.0
    %610 = vmatpush1.msra.mxu0 %v265
    %611 = vmatprep.subr.mxu0 0.0
    %612 = vmatpush1.msra.mxu0 %v268
    %613 = vmatprep.subr.mxu0 0.0
    %614 = vmatpush1.msra.mxu0 %v271
    %615 = vmatprep.subr.mxu0 0.0
    %616 = vmatpush1.msra.mxu0 %v274
    %617 = vmatprep.subr.mxu0 0.0
    %618 = vmatpush1.msra.mxu0 %v277
    %619 = vmatprep.subr.mxu0 0.0
    %620 = vmatpush1.msra.mxu0 %v280
    %621 = vmatprep.subr.mxu0 0.0
    %622 = vmatpush1.msra.mxu0 %v283
    %623 = vmatprep.subr.mxu0 0.0
    %624 = vmatpush1.msra.mxu0 %v286
    %625 = vmatprep.subr.mxu0 0.0
    %626 = vmatpush1.msra.mxu0 %v289
    %627 = vmatprep.subr.mxu0 0.0
    %628 = vmatpush1.msra.mxu0 %v292
    %629 = vmatprep.subr.mxu0 0.0
    %630 = vmatpush1.msra.mxu0 %v295
    %631 = vmatprep.subr.mxu0 0.0
    %632 = vmatpush1.msra.mxu0 %v298
    %633 = vmatprep.subr.mxu0 0.0
    %634 = vmatpush1.msra.mxu0 %v301
    %635 = vmatprep.subr.mxu0 0.0
    %636 = vmatpush1.msra.mxu0 %v304
    %637 = vmatprep.subr.mxu0 0.0
    %638 = vmatpush1.msra.mxu0 %v307
    %639 = vmatprep.subr.mxu0 0.0
    %640 = vmatpush1.msra.mxu0 %v310
    %641 = vmatprep.subr.mxu0 0.0
    %642 = vmatpush1.msra.mxu0 %v313
    %643 = vmatprep.subr.mxu0 0.0
    %644 = vmatpush1.msra.mxu0 %v316
    %645 = vmatprep.subr.mxu0 0.0
    %646 = vmatpush1.msra.mxu0 %v319
    %647 = vmatprep.subr.mxu0 0.0
    %648 = vmatpush1.msra.mxu0 %v322
    %649 = vmatprep.subr.mxu0 0.0
    %650 = vmatpush1.msra.mxu0 %v325
    %651 = vmatprep.subr.mxu0 0.0
    %652 = vmatpush1.msra.mxu0 %v328
    %653 = vmatprep.subr.mxu0 0.0
    %654 = vmatpush1.msra.mxu0 %v331
    %655 = vmatprep.subr.mxu0 0.0
    %656 = vmatpush1.msra.mxu0 %v334
    %657 = vmatprep.subr.mxu0 0.0
    %658 = vmatpush1.msra.mxu0 %v337
    %659 = vmatprep.subr.mxu0 0.0
    %660 = vmatpush1.msra.mxu0 %v340
    %661 = vmatprep.subr.mxu0 0.0
    %662 = vmatpush1.msra.mxu0 %v343
    %663 = vmatprep.mubr.f32.mxu0 %v245
    %664 = vmatmul.mubr.f32.gmra.mrb[0].mxu0 %v244
    %v665 = vpop.f32.mrb[0].mxu0
    %v666 = vadd.f32 %v453, %v665
    %v667 = vpop.f32.mrb[0].mxu0
    %668 = vdwg.mxu0
    %669 = vmatprep.subr.mxu0 0.0
    %670 = vmatpush1.msra.mxu0 %v346
    %671 = vmatprep.subr.mxu0 0.0
    %672 = vmatpush1.msra.mxu0 %v349
    %673 = vmatprep.subr.mxu0 0.0
    %674 = vmatpush1.msra.mxu0 %v352
    %675 = vmatprep.subr.mxu0 0.0
    %676 = vmatpush1.msra.mxu0 %v355
    %677 = vmatprep.subr.mxu0 0.0
    %678 = vmatpush1.msra.mxu0 %v358
    %679 = vmatprep.subr.mxu0 0.0
    %680 = vmatpush1.msra.mxu0 %v361
    %681 = vmatprep.subr.mxu0 0.0
    %682 = vmatpush1.msra.mxu0 %v364
    %683 = vmatprep.subr.mxu0 0.0
    %684 = vmatpush1.msra.mxu0 %v367
    %685 = vmatprep.subr.mxu0 0.0
    %686 = vmatpush1.msra.mxu0 %v370
    %687 = vmatprep.subr.mxu0 0.0
    %688 = vmatpush1.msra.mxu0 %v373
    %689 = vmatprep.subr.mxu0 0.0
    %690 = vmatpush1.msra.mxu0 %v376
    %691 = vmatprep.subr.mxu0 0.0
    %692 = vmatpush1.msra.mxu0 %v379
    %693 = vmatprep.subr.mxu0 0.0
    %694 = vmatpush1.msra.mxu0 %v382
    %695 = vmatprep.subr.mxu0 0.0
    %696 = vmatpush1.msra.mxu0 %v385
    %697 = vmatprep.subr.mxu0 0.0
    %698 = vmatpush1.msra.mxu0 %v388
    %699 = vmatprep.subr.mxu0 0.0
    %700 = vmatpush1.msra.mxu0 %v391
    %701 = vmatprep.subr.mxu0 0.0
    %702 = vmatpush1.msra.mxu0 %v394
    %703 = vmatprep.subr.mxu0 0.0
    %704 = vmatpush1.msra.mxu0 %v397
    %705 = vmatprep.subr.mxu0 0.0
    %706 = vmatpush1.msra.mxu0 %v400
    %707 = vmatprep.subr.mxu0 0.0
    %708 = vmatpush1.msra.mxu0 %v403
    %709 = vmatprep.subr.mxu0 0.0
    %710 = vmatpush1.msra.mxu0 %v406
    %711 = vmatprep.subr.mxu0 0.0
    %712 = vmatpush1.msra.mxu0 %v409
    %713 = vmatprep.subr.mxu0 0.0
    %714 = vmatpush1.msra.mxu0 %v412
    %715 = vmatprep.subr.mxu0 0.0
    %716 = vmatpush1.msra.mxu0 %v415
    %717 = vmatprep.subr.mxu0 0.0
    %718 = vmatpush1.msra.mxu0 %v418
    %719 = vmatprep.subr.mxu0 0.0
    %720 = vmatpush1.msra.mxu0 %v421
    %721 = vmatprep.subr.mxu0 0.0
    %722 = vmatpush1.msra.mxu0 %v424
    %723 = vmatprep.subr.mxu0 0.0
    %724 = vmatpush1.msra.mxu0 %v427
    %725 = vmatprep.subr.mxu0 0.0
    %726 = vmatpush1.msra.mxu0 %v430
    %727 = vmatprep.subr.mxu0 0.0
    %728 = vmatpush1.msra.mxu0 %v433
    %729 = vmatprep.subr.mxu0 0.0
    %730 = vmatpush1.msra.mxu0 %v436
    %731 = vmatprep.subr.mxu0 0.0
    %732 = vmatpush1.msra.mxu0 %v439
    %733 = vmatprep.mubr.f32.mxu0 %v247
    %734 = vmatmul.mubr.f32.gmra.mrb[0].mxu0 %v246
    %v735 = vpop.f32.mrb[0].mxu0
    %v736 = vadd.f32 %v666, %v735
    %v737 = vpop.f32.mrb[0].mxu0
    %738 = vdwg.mxu0
    %v739 = vmax.f32 %v595, 0.0
    %v740 = vmax.f32 %v597, 0.0
    %v741 = vmax.f32 %v736, 0.0
    %v742 = vld [vmem:[#allocation6] sm:$0xff]
    %v743 = vld [vmem:[#allocation6 + $0x8] sm:$0xff]
    %v744 = vld [vmem:[#allocation6 + $0x10] sm:$0xff]
    %v745 = vld [vmem:[#allocation6 + $0x18] sm:$0xff]
    %v746 = vld [vmem:[#allocation6 + $0x20] sm:$0xff]
    %v747 = vld [vmem:[#allocation6 + $0x28] sm:$0xff]
    %v748 = vld [vmem:[#allocation6 + $0x30] sm:$0xff]
    %v749 = vld [vmem:[#allocation6 + $0x38] sm:$0xff]
    %v750 = vld [vmem:[#allocation6 + $0x40] sm:$0xff]
    %v751 = vld [vmem:[#allocation6 + $0x48] sm:$0xff]
    %v752 = vld [vmem:[#allocation6 + $0x50] sm:$0xff]
    %v753 = vld [vmem:[#allocation6 + $0x58] sm:$0xff]
    %v754 = vld [vmem:[#allocation6 + $0x60] sm:$0xff]
    %v755 = vld [vmem:[#allocation6 + $0x68] sm:$0xff]
    %v756 = vld [vmem:[#allocation6 + $0x70] sm:$0xff]
    %v757 = vld [vmem:[#allocation6 + $0x78] sm:$0xff]
    %v758 = vld [vmem:[#allocation6 + $0x80] sm:$0xff]
    %v759 = vld [vmem:[#allocation6 + $0x88] sm:$0xff]
    %v760 = vld [vmem:[#allocation6 + $0x90] sm:$0xff]
    %v761 = vld [vmem:[#allocation6 + $0x98] sm:$0xff]
    %v762 = vld [vmem:[#allocation6 + $0xa0] sm:$0xff]
    %v763 = vld [vmem:[#allocation6 + $0xa8] sm:$0xff]
    %v764 = vld [vmem:[#allocation6 + $0xb0] sm:$0xff]
    %v765 = vld [vmem:[#allocation6 + $0xb8] sm:$0xff]
    %v766 = vld [vmem:[#allocation6 + $0xc0] sm:$0xff]
    %v767 = vld [vmem:[#allocation6 + $0xc8] sm:$0xff]
    %v768 = vld [vmem:[#allocation6 + $0xd0] sm:$0xff]
    %v769 = vld [vmem:[#allocation6 + $0xd8] sm:$0xff]
    %v770 = vld [vmem:[#allocation6 + $0xe0] sm:$0xff]
    %v771 = vld [vmem:[#allocation6 + $0xe8] sm:$0xff]
    %v772 = vld [vmem:[#allocation6 + $0xf0] sm:$0xff]
    %v773 = vld [vmem:[#allocation6 + $0xf8] sm:$0xff]
    %v774 = vld [vmem:[#allocation6 + $0x100] sm:$0xff]
    %v775 = vld [vmem:[#allocation6 + $0x108] sm:$0xff]
    %v776 = vld [vmem:[#allocation6 + $0x110] sm:$0xff]
    %v777 = vld [vmem:[#allocation6 + $0x118] sm:$0xff]
    %v778 = vld [vmem:[#allocation6 + $0x120] sm:$0xff]
    %v779 = vld [vmem:[#allocation6 + $0x128] sm:$0xff]
    %v780 = vld [vmem:[#allocation6 + $0x130] sm:$0xff]
    %v781 = vld [vmem:[#allocation6 + $0x138] sm:$0xff]
    %v782 = vld [vmem:[#allocation6 + $0x140] sm:$0xff]
    %v783 = vld [vmem:[#allocation6 + $0x148] sm:$0xff]
    %v784 = vld [vmem:[#allocation6 + $0x150] sm:$0xff]
    %v785 = vld [vmem:[#allocation6 + $0x158] sm:$0xff]
    %v786 = vld [vmem:[#allocation6 + $0x160] sm:$0xff]
    %v787 = vld [vmem:[#allocation6 + $0x168] sm:$0xff]
    %v788 = vld [vmem:[#allocation6 + $0x170] sm:$0xff]
    %v789 = vld [vmem:[#allocation6 + $0x178] sm:$0xff]
    %v790 = vld [vmem:[%s6] sm:$0x1]
    %v792 = vlaneseq
    %v793 = vshrl.u32 %v792, 7
    %v794 = vsub.s32 0, %v793
    %v795 = vrot.slane %v790, %v794
    %797 = vmatprep.subr.mxu0 0.0
    %798 = vmatpush1.msra.mxu0 %v742
    %799 = vmatprep.subr.mxu0 0.0
    %800 = vmatpush1.msra.mxu0 %v743
    %801 = vmatprep.subr.mxu0 0.0
    %802 = vmatpush1.msra.mxu0 %v744
    %803 = vmatprep.subr.mxu0 0.0
    %804 = vmatpush1.msra.mxu0 %v745
    %805 = vmatprep.subr.mxu0 0.0
    %806 = vmatpush1.msra.mxu0 %v746
    %807 = vmatprep.subr.mxu0 0.0
    %808 = vmatpush1.msra.mxu0 %v747
    %809 = vmatprep.subr.mxu0 0.0
    %810 = vmatpush1.msra.mxu0 %v748
    %811 = vmatprep.subr.mxu0 0.0
    %812 = vmatpush1.msra.mxu0 %v749
    %813 = vmatprep.subr.mxu0 0.0
    %814 = vmatpush1.msra.mxu0 %v750
    %815 = vmatprep.subr.mxu0 0.0
    %816 = vmatpush1.msra.mxu0 %v751
    %817 = vmatprep.subr.mxu0 0.0
    %818 = vmatpush1.msra.mxu0 %v752
    %819 = vmatprep.subr.mxu0 0.0
    %820 = vmatpush1.msra.mxu0 %v753
    %821 = vmatprep.subr.mxu0 0.0
    %822 = vmatpush1.msra.mxu0 %v754
    %823 = vmatprep.subr.mxu0 0.0
    %824 = vmatpush1.msra.mxu0 %v755
    %825 = vmatprep.subr.mxu0 0.0
    %826 = vmatpush1.msra.mxu0 %v756
    %827 = vmatprep.subr.mxu0 0.0
    %828 = vmatpush1.msra.mxu0 %v757
    %829 = vmatprep.subr.mxu0 0.0
    %830 = vmatpush1.msra.mxu0 %v758
    %831 = vmatprep.subr.mxu0 0.0
    %832 = vmatpush1.msra.mxu0 %v759
    %833 = vmatprep.subr.mxu0 0.0
    %834 = vmatpush1.msra.mxu0 %v760
    %835 = vmatprep.subr.mxu0 0.0
    %836 = vmatpush1.msra.mxu0 %v761
    %837 = vmatprep.subr.mxu0 0.0
    %838 = vmatpush1.msra.mxu0 %v762
    %839 = vmatprep.subr.mxu0 0.0
    %840 = vmatpush1.msra.mxu0 %v763
    %841 = vmatprep.subr.mxu0 0.0
    %842 = vmatpush1.msra.mxu0 %v764
    %843 = vmatprep.subr.mxu0 0.0
    %844 = vmatpush1.msra.mxu0 %v765
    %845 = vmatprep.subr.mxu0 0.0
    %846 = vmatpush1.msra.mxu0 %v766
    %847 = vmatprep.subr.mxu0 0.0
    %848 = vmatpush1.msra.mxu0 %v767
    %849 = vmatprep.subr.mxu0 0.0
    %850 = vmatpush1.msra.mxu0 %v768
    %851 = vmatprep.subr.mxu0 0.0
    %852 = vmatpush1.msra.mxu0 %v769
    %853 = vmatprep.subr.mxu0 0.0
    %854 = vmatpush1.msra.mxu0 %v770
    %855 = vmatprep.subr.mxu0 0.0
    %856 = vmatpush1.msra.mxu0 %v771
    %857 = vmatprep.subr.mxu0 0.0
    %858 = vmatpush1.msra.mxu0 %v772
    %859 = vmatprep.subr.mxu0 0.0
    %860 = vmatpush1.msra.mxu0 %v773
    %861 = vmatprep.mubr.f32.mxu0 %v740
    %862 = vmatmul.mubr.f32.gmra.mrb[0].mxu0 %v739
    %v863 = vpop.f32.mrb[0].mxu0
    %v864 = vadd.f32 %v795, %v863
    %v865 = vpop.f32.mrb[0].mxu0
    %866 = vdwg.mxu0
    %867 = vmatprep.subr.mxu0 0.0
    %868 = vmatpush1.msra.mxu0 %v774
    %869 = vmatprep.subr.mxu0 0.0
    %870 = vmatpush1.msra.mxu0 %v775
    %871 = vmatprep.subr.mxu0 0.0
    %872 = vmatpush1.msra.mxu0 %v776
    %873 = vmatprep.subr.mxu0 0.0
    %874 = vmatpush1.msra.mxu0 %v777
    %875 = vmatprep.subr.mxu0 0.0
    %876 = vmatpush1.msra.mxu0 %v778
    %877 = vmatprep.subr.mxu0 0.0
    %878 = vmatpush1.msra.mxu0 %v779
    %879 = vmatprep.subr.mxu0 0.0
    %880 = vmatpush1.msra.mxu0 %v780
    %881 = vmatprep.subr.mxu0 0.0
    %882 = vmatpush1.msra.mxu0 %v781
    %883 = vmatprep.subr.mxu0 0.0
    %884 = vmatpush1.msra.mxu0 %v782
    %885 = vmatprep.subr.mxu0 0.0
    %886 = vmatpush1.msra.mxu0 %v783
    %887 = vmatprep.subr.mxu0 0.0
    %888 = vmatpush1.msra.mxu0 %v784
    %889 = vmatprep.subr.mxu0 0.0
    %890 = vmatpush1.msra.mxu0 %v785
    %891 = vmatprep.subr.mxu0 0.0
    %892 = vmatpush1.msra.mxu0 %v786
    %893 = vmatprep.subr.mxu0 0.0
    %894 = vmatpush1.msra.mxu0 %v787
    %895 = vmatprep.subr.mxu0 0.0
    %896 = vmatpush1.msra.mxu0 %v788
    %897 = vmatprep.subr.mxu0 0.0
    %898 = vmatpush1.msra.mxu0 %v789
    %899 = vmatprep.subr.mxu0 0.0
    %900 = vmatpush1.msra.mxu0 0.0
    %901 = vmatprep.subr.mxu0 0.0
    %902 = vmatpush1.msra.mxu0 0.0
    %903 = vmatprep.subr.mxu0 0.0
    %904 = vmatpush1.msra.mxu0 0.0
    %905 = vmatprep.subr.mxu0 0.0
    %906 = vmatpush1.msra.mxu0 0.0
    %907 = vmatprep.subr.mxu0 0.0
    %908 = vmatpush1.msra.mxu0 0.0
    %909 = vmatprep.subr.mxu0 0.0
    %910 = vmatpush1.msra.mxu0 0.0
    %911 = vmatprep.subr.mxu0 0.0
    %912 = vmatpush1.msra.mxu0 0.0
    %913 = vmatprep.subr.mxu0 0.0
    %914 = vmatpush1.msra.mxu0 0.0
    %915 = vmatprep.subr.mxu0 0.0
    %916 = vmatpush1.msra.mxu0 0.0
    %917 = vmatprep.subr.mxu0 0.0
    %918 = vmatpush1.msra.mxu0 0.0
    %919 = vmatprep.subr.mxu0 0.0
    %920 = vmatpush1.msra.mxu0 0.0
    %921 = vmatprep.subr.mxu0 0.0
    %922 = vmatpush1.msra.mxu0 0.0
    %923 = vmatprep.subr.mxu0 0.0
    %924 = vmatpush1.msra.mxu0 0.0
    %925 = vmatprep.subr.mxu0 0.0
    %926 = vmatpush1.msra.mxu0 0.0
    %927 = vmatprep.subr.mxu0 0.0
    %928 = vmatpush1.msra.mxu0 0.0
    %929 = vmatprep.subr.mxu0 0.0
    %930 = vmatpush1.msra.mxu0 0.0
    %931 = vmatprep.mubr.f32.mxu0 0.0
    %932 = vmatmul.mubr.f32.gmra.mrb[0].mxu0 %v741
    %v933 = vpop.f32.mrb[0].mxu0
    %v934 = vadd.f32 %v864, %v933
    %v935 = vpop.f32.mrb[0].mxu0
    %936 = vdwg.mxu0
    %v937 = vtanh.pop %v934
    %v938 = vmul.f32 %v937, 2.0
    %v939 = vcvt.f32.s32.ties.to.even %v938
    %940 = vst [vmem:[%s7] sm:$0xff] %v939
    // Predicated region
    $region42: #{_actor_forward_jit.1} parent=1 // pred_check
      _
    $region43: #{_actor_forward_jit.1} parent=1 // pred_check_branch
      %942 = sbr.rel (0) target = $region45
    $region44: #{_actor_forward_jit.1} parent=1 // pred_region
      _
    $region45: #{_actor_forward_jit.1} parent=1 // pred_fallthru
      _
    // Predicated region
    $region46: #{_actor_forward_jit.1} parent=1 // pred_check
      _
    $region47: #{_actor_forward_jit.1} parent=1 // pred_check_branch
      %944 = sbr.rel (0) target = $region49
    $region48: #{_actor_forward_jit.1} parent=1 // pred_region
      _
    $region49: #{_actor_forward_jit.1} parent=1 // pred_fallthru
      _
    %945 = vsyncpa [#allocation3], 1
    %946 = vsyncpa [#allocation5], 1

</llo_original>
